<compile_context>
chip_gen: v7x
topology: tpu7x:2x2x1
jax: 0.10.0
libtpu: 0.0.40
codegen_flags: <defaults>
</compile_context>

<pallas_src>
import functools

import jax
import jax.numpy as jnp
from jax import lax
from jax.experimental import pallas as pl
from jax.experimental.pallas import tpu as pltpu


def _linear_sigmoid_kernel(x_ref, w_ref, b_ref, o_ref):
    # x_ref: [tm, D], w_ref: [Lp, D], b_ref: [1, Lp], o_ref: [tm, Lp]
    # Contract x's dim-1 with w's dim-1 (i.e. x @ w.T) directly on the MXU —
    # no wrapper-side transpose of the weight.
    logits = lax.dot_general(
        x_ref[...],
        w_ref[...],
        dimension_numbers=(((1,), (1,)), ((), ())),
        preferred_element_type=jnp.float32,
    )
    logits = logits + b_ref[...]            # broadcast [1, Lp] over batch tile
    o_ref[...] = jax.nn.sigmoid(logits).astype(o_ref.dtype)


def _round_up(x, m):
    return ((x + m - 1) // m) * m


@functools.partial(jax.jit, static_argnames=())
def linear_classifier_forward(x, weight, bias):
    """x: [B, D] f32, weight: [L, D] (PyTorch layout), bias: [L] f32."""
    B, D = x.shape
    L = weight.shape[0]

    # --- Lane-dense / sublane-dense padding ---------------------------------
    # Output lanes: pad L up to a multiple of 128 so stores are unmasked.
    Lp = _round_up(L, 128)
    # Batch sublanes: pad B up to a multiple of 8.
    Bp = _round_up(B, 8)

    x_p = x if Bp == B else jnp.pad(x, ((0, Bp - B), (0, 0)))
    w_p = weight if Lp == L else jnp.pad(weight, ((0, Lp - L), (0, 0)))
    b_p = (bias if Lp == L else jnp.pad(bias, (0, Lp - L))).reshape(1, Lp)

    # --- Batch tiling --------------------------------------------------------
    # Biggest reasonable batch tile (multiple of 8, capped so VMEM stays tiny
    # even on v7x's 64 MiB / 32 MiB scoped default). For B=8 this is one tile.
    tm = min(Bp, 256)
    grid = (Bp // tm,)

    out_p = pl.pallas_call(
        _linear_sigmoid_kernel,
        out_shape=jax.ShapeDtypeStruct((Bp, Lp), jnp.float32),
        grid=grid,
        in_specs=[
            pl.BlockSpec((tm, D), lambda i: (i, 0)),   # x tile over batch
            pl.BlockSpec((Lp, D), lambda i: (0, 0)),   # full weight, resident
            pl.BlockSpec((1, Lp), lambda i: (0, 0)),   # bias row
        ],
        out_specs=pl.BlockSpec((tm, Lp), lambda i: (i, 0)),
        compiler_params=pltpu.CompilerParams(
            dimension_semantics=("parallel",),         # shard batch across TCs
        ),
    )(x_p, w_p, b_p)

    # Strip batch / label padding.
    return out_p[:B, :L]


if __name__ == "__main__":
    # Small shapes consistent with the module: batch=8, dim=32, num_labels=2.
    B, D, L = 8, 32, 2

    key = jax.random.PRNGKey(0)
    kx, kw, kb = jax.random.split(key, 3)

    x = jax.random.normal(kx, (B, D), dtype=jnp.float32)

    # Deterministic nn.Linear-style init: uniform(-1/sqrt(dim), 1/sqrt(dim)).
    bound = 1.0 / (D ** 0.5)
    weight = jax.random.uniform(kw, (L, D), dtype=jnp.float32,
                                minval=-bound, maxval=bound)
    bias = jax.random.uniform(kb, (L,), dtype=jnp.float32,
                              minval=-bound, maxval=bound)

    out = linear_classifier_forward(x, weight, bias)
    out = jax.block_until_ready(out)

    # Sanity check against pure-JAX reference.
    ref = jax.nn.sigmoid(x @ weight.T + bias)
    assert out.shape == (B, L)
    assert jnp.allclose(out, ref, atol=1e-5, rtol=1e-5)

    print("KERNEL_OK")
</pallas_src>

<mosaic_0001>
module attributes {stable_mosaic.version = 11 : i64} {
  func.func @_linear_sigmoid_kernel(%arg0: i32, %arg1: memref<8x32xf32, #tpu.memory_space<vmem>>, %arg2: memref<128x32xf32, #tpu.memory_space<vmem>>, %arg3: memref<1x128xf32, #tpu.memory_space<vmem>>, %arg4: memref<8x128xf32, #tpu.memory_space<vmem>>) attributes {dimension_semantics = [#tpu.dimension_semantics<parallel>], iteration_bounds = array<i64: 1>, scalar_prefetch = 0 : i64, scratch_operands = 0 : i64, tpu.core_type = #tpu.core_type<tc>, window_params = [{transform_indices = @transform_0, window_bounds = array<i64: 8, 32>}, {pipeline_mode = #tpu.pipeline_mode<synchronous>, transform_indices = @transform_1, window_bounds = array<i64: 128, 32>}, {pipeline_mode = #tpu.pipeline_mode<synchronous>, transform_indices = @transform_2, window_bounds = array<i64: 1, 128>}, {transform_indices = @transform_3, window_bounds = array<i64: 8, 128>}]} {
    %c0 = arith.constant 0 : index
    %c0_0 = arith.constant 0 : index
    %0 = vector.load %arg1[%c0, %c0_0] : memref<8x32xf32, #tpu.memory_space<vmem>>, vector<8x32xf32>
    %c0_1 = arith.constant 0 : index
    %c0_2 = arith.constant 0 : index
    %1 = vector.load %arg2[%c0_1, %c0_2] : memref<128x32xf32, #tpu.memory_space<vmem>>, vector<128x32xf32>
    %cst = arith.constant dense<0.000000e+00> : vector<8x128xf32>
    %2 = tpu.matmul %0, %1, %cst {dimension_numbers = #tpu.dot_dimension_numbers<[1], [1], [0], [0], [0, 0, 1, 0], [], []>} : vector<8x32xf32>, vector<128x32xf32>, vector<8x128xf32> -> vector<8x128xf32>
    %c0_3 = arith.constant 0 : index
    %c0_4 = arith.constant 0 : index
    %3 = vector.load %arg3[%c0_3, %c0_4] : memref<1x128xf32, #tpu.memory_space<vmem>>, vector<1x128xf32>
    %4 = vector.broadcast %3 : vector<1x128xf32> to vector<8x128xf32>
    %5 = arith.addf %2, %4 : vector<8x128xf32>
    %6 = arith.negf %5 : vector<8x128xf32>
    %7 = math.exp %6 : vector<8x128xf32>
    %cst_5 = arith.constant 1.000000e+00 : f32
    %8 = vector.broadcast %cst_5 : f32 to vector<8x128xf32>
    %9 = arith.addf %8, %7 : vector<8x128xf32>
    %10 = arith.divf %8, %9 : vector<8x128xf32>
    %c0_6 = arith.constant 0 : index
    %c0_7 = arith.constant 0 : index
    %11 = vector.load %arg4[%c0_6, %c0_7] : memref<8x128xf32, #tpu.memory_space<vmem>>, vector<8x128xf32>
    tpu.vector_store %arg4[%c0_6, %c0_7], %10 {strides = array<i32>} : memref<8x128xf32, #tpu.memory_space<vmem>>, vector<8x128xf32>,
    return
  }
  func.func @transform_0(%arg0: i32) -> (i32, i32) {
    %c0_i32 = arith.constant 0 : i32
    %c0_i32_0 = arith.constant 0 : i32
    return %arg0, %c0_i32 : i32, i32
  }
  func.func @transform_1(%arg0: i32) -> (i32, i32) {
    %c0_i32 = arith.constant 0 : i32
    %c0_i32_0 = arith.constant 0 : i32
    %c0_i32_1 = arith.constant 0 : i32
    return %c0_i32, %c0_i32_0 : i32, i32
  }
  func.func @transform_2(%arg0: i32) -> (i32, i32) {
    %c0_i32 = arith.constant 0 : i32
    %c0_i32_0 = arith.constant 0 : i32
    %c0_i32_1 = arith.constant 0 : i32
    return %c0_i32, %c0_i32_0 : i32, i32
  }
  func.func @transform_3(%arg0: i32) -> (i32, i32) {
    %c0_i32 = arith.constant 0 : i32
    %c0_i32_0 = arith.constant 0 : i32
    return %arg0, %c0_i32 : i32, i32
  }
}

</mosaic_0001>

<llo_original>
// kernel: linear_classifier_forward.1
$region0: #{linear_classifier_forward.1}
  #allocation0 [shape = 'u32[]', space=smem, size = 0x4, offset = 0x4, fixed_abs, tag = 'smem constant byte address 0x4 - core index']
  #allocation1 [shape = 'u32[144,128]{1,0:T(1,128)}', space=vmem, size = 0x12000, scoped, tag = 'internal scratch']
  %s0 = inlined_call_operand.vmem [shape: f32[8,32], index: 0, kind: input, shape index: {}]
  %s1 = inlined_call_operand.vmem [shape: f32[128,32], index: 1, kind: input, shape index: {}]
  %s2 = inlined_call_operand.vmem [shape: f32[1,128], index: 2, kind: input, shape index: {}]
  %s3 = inlined_call_operand.vmem [shape: f32[8,128], index: 3, kind: output, shape index: {}]
  %s4 = sld [smem:[#allocation0]]
  $region22: #{linear_classifier_forward.1} parent=0
    _
  %s6 = ssub.s32 1, %s4
  %s7 = scalar_select 0, %s6, %s4
  // Predicated region
  $region2: #{linear_classifier_forward.1} parent=0 // pred_check
    _
  $region3: #{linear_classifier_forward.1} parent=0 // pred_check_branch
    %9 = sbr.rel (0) target = $region5
  $region4: #{linear_classifier_forward.1} parent=0 // pred_region
    _
  $region5: #{linear_classifier_forward.1} parent=0 // pred_fallthru
    _
  // Predicated region
  $region6: #{linear_classifier_forward.1} parent=0 // pred_check
    _
  $region7: #{linear_classifier_forward.1} parent=0 // pred_check_branch
    %11 = sbr.rel (0) target = $region9
  $region8: #{linear_classifier_forward.1} parent=0 // pred_region
    _
  $region9: #{linear_classifier_forward.1} parent=0 // pred_fallthru
    _
  // Predicated region
  $region10: #{linear_classifier_forward.1} parent=0 // pred_check
    _
  $region11: #{linear_classifier_forward.1} parent=0 // pred_check_branch
    %13 = sbr.rel (0) target = $region13
  $region12: #{linear_classifier_forward.1} parent=0 // pred_region
    _
  $region13: #{linear_classifier_forward.1} parent=0 // pred_fallthru
    _
  %v14 = vld [vmem:[%s0] sm:$0xff]
  %v15 = vld [vmem:[%s1] sm:$0xff]
  %v16 = vld [vmem:[%s1 + $0x8] sm:$0xff]
  %v17 = vld [vmem:[%s1 + $0x10] sm:$0xff]
  %v18 = vld [vmem:[%s1 + $0x18] sm:$0xff]
  %v19 = vld [vmem:[%s1 + $0x20] sm:$0xff]
  %v20 = vld [vmem:[%s1 + $0x28] sm:$0xff]
  %v21 = vld [vmem:[%s1 + $0x30] sm:$0xff]
  %v22 = vld [vmem:[%s1 + $0x38] sm:$0xff]
  %v23 = vld [vmem:[%s1 + $0x40] sm:$0xff]
  %v24 = vld [vmem:[%s1 + $0x48] sm:$0xff]
  %v25 = vld [vmem:[%s1 + $0x50] sm:$0xff]
  %v26 = vld [vmem:[%s1 + $0x58] sm:$0xff]
  %v27 = vld [vmem:[%s1 + $0x60] sm:$0xff]
  %v28 = vld [vmem:[%s1 + $0x68] sm:$0xff]
  %v29 = vld [vmem:[%s1 + $0x70] sm:$0xff]
  %v30 = vld [vmem:[%s1 + $0x78] sm:$0xff]
  %v31 = vld [vmem:[%s2] sm:$0x1]
  %v33 = vlaneseq
  %v34 = vshrl.u32 %v33, 7
  %v35 = vsub.s32 0, %v34
  %v36 = vrot.slane %v31, %v35
  %vm38 = vcmask 261120
  %v40 = vsel %vm38, %v14, 0
  %v43 = vsel %vm38, %v15, 0
  %v46 = vsel %vm38, %v16, 0
  %v49 = vsel %vm38, %v17, 0
  %v52 = vsel %vm38, %v18, 0
  %v55 = vsel %vm38, %v19, 0
  %v58 = vsel %vm38, %v20, 0
  %v61 = vsel %vm38, %v21, 0
  %v64 = vsel %vm38, %v22, 0
  %v67 = vsel %vm38, %v23, 0
  %v70 = vsel %vm38, %v24, 0
  %v73 = vsel %vm38, %v25, 0
  %v76 = vsel %vm38, %v26, 0
  %v79 = vsel %vm38, %v27, 0
  %v82 = vsel %vm38, %v28, 0
  %v85 = vsel %vm38, %v29, 0
  %v88 = vsel %vm38, %v30, 0
  %90 = vmatprep.subr.mxu0 0.0
  %91 = vmatpush1.xpose.msra.mxu0 %v43
  %92 = vmatprep.subr.mxu0 0.0
  %93 = vmatpush1.xpose.msra.mxu0 %v46
  %94 = vmatprep.subr.mxu0 0.0
  %95 = vmatpush1.xpose.msra.mxu0 %v49
  %96 = vmatprep.subr.mxu0 0.0
  %97 = vmatpush1.xpose.msra.mxu0 %v52
  %98 = vmatprep.subr.mxu0 0.0
  %99 = vmatpush1.xpose.msra.mxu0 %v55
  %100 = vmatprep.subr.mxu0 0.0
  %101 = vmatpush1.xpose.msra.mxu0 %v58
  %102 = vmatprep.subr.mxu0 0.0
  %103 = vmatpush1.xpose.msra.mxu0 %v61
  %104 = vmatprep.subr.mxu0 0.0
  %105 = vmatpush1.xpose.msra.mxu0 %v64
  %106 = vmatprep.subr.mxu0 0.0
  %107 = vmatpush1.xpose.msra.mxu0 %v67
  %108 = vmatprep.subr.mxu0 0.0
  %109 = vmatpush1.xpose.msra.mxu0 %v70
  %110 = vmatprep.subr.mxu0 0.0
  %111 = vmatpush1.xpose.msra.mxu0 %v73
  %112 = vmatprep.subr.mxu0 0.0
  %113 = vmatpush1.xpose.msra.mxu0 %v76
  %114 = vmatprep.subr.mxu0 0.0
  %115 = vmatpush1.xpose.msra.mxu0 %v79
  %116 = vmatprep.subr.mxu0 0.0
  %117 = vmatpush1.xpose.msra.mxu0 %v82
  %118 = vmatprep.subr.mxu0 0.0
  %119 = vmatpush1.xpose.msra.mxu0 %v85
  %120 = vmatprep.subr.mxu0 0.0
  %121 = vmatpush1.xpose.msra.mxu0 %v88
  %122 = vmatprep.subr.mxu0 0.0
  %123 = vmatpush1.xpose.msra.mxu0 0.0
  %124 = vmatprep.subr.mxu0 0.0
  %125 = vmatpush1.xpose.msra.mxu0 0.0
  %126 = vmatprep.subr.mxu0 0.0
  %127 = vmatpush1.xpose.msra.mxu0 0.0
  %128 = vmatprep.subr.mxu0 0.0
  %129 = vmatpush1.xpose.msra.mxu0 0.0
  %130 = vmatprep.subr.mxu0 0.0
  %131 = vmatpush1.xpose.msra.mxu0 0.0
  %132 = vmatprep.subr.mxu0 0.0
  %133 = vmatpush1.xpose.msra.mxu0 0.0
  %134 = vmatprep.subr.mxu0 0.0
  %135 = vmatpush1.xpose.msra.mxu0 0.0
  %136 = vmatprep.subr.mxu0 0.0
  %137 = vmatpush1.xpose.msra.mxu0 0.0
  %138 = vmatprep.subr.mxu0 0.0
  %139 = vmatpush1.xpose.msra.mxu0 0.0
  %140 = vmatprep.subr.mxu0 0.0
  %141 = vmatpush1.xpose.msra.mxu0 0.0
  %142 = vmatprep.subr.mxu0 0.0
  %143 = vmatpush1.xpose.msra.mxu0 0.0
  %144 = vmatprep.subr.mxu0 0.0
  %145 = vmatpush1.xpose.msra.mxu0 0.0
  %146 = vmatprep.subr.mxu0 0.0
  %147 = vmatpush1.xpose.msra.mxu0 0.0
  %148 = vmatprep.subr.mxu0 0.0
  %149 = vmatpush1.xpose.msra.mxu0 0.0
  %150 = vmatprep.subr.mxu0 0.0
  %151 = vmatpush1.xpose.msra.mxu0 0.0
  %152 = vmatprep.subr.mxu0 0.0
  %153 = vmatpush1.xpose.msra.mxu0 0.0
  %154 = vmatprep.mubr.f32.mxu0 0.0
  %155 = vmatmul.mubr.f32.gmra.mrb[0].mxu0 %v40
  %v156 = vpop.f32.mrb[0].mxu0
  %v157 = vadd.f32 %v36, %v156
  %v158 = vpop.f32.mrb[0].mxu0
  %159 = vdwg.mxu0
  %v160 = vxor.u32 %v157, 2147483648
  %v161 = vmul.f32 %v160, 1.442695
  %v162 = vpow.pop %v161
  %v163 = vadd.f32 %v162, 1.0
  %v164 = vrcp.pop %v163
  %v165 = vmul.f32 1.0, %v164
  %166 = vst [vmem:[%s3] sm:$0xff] %v165
  // Predicated region
  $region14: #{linear_classifier_forward.1} parent=0 // pred_check
    _
  $region15: #{linear_classifier_forward.1} parent=0 // pred_check_branch
    %168 = sbr.rel (0) target = $region17
  $region16: #{linear_classifier_forward.1} parent=0 // pred_region
    _
  $region17: #{linear_classifier_forward.1} parent=0 // pred_fallthru
    _
  // Predicated region
  $region18: #{linear_classifier_forward.1} parent=0 // pred_check
    _
  $region19: #{linear_classifier_forward.1} parent=0 // pred_check_branch
    %170 = sbr.rel (0) target = $region21
  $region20: #{linear_classifier_forward.1} parent=0 // pred_region
    _
  $region21: #{linear_classifier_forward.1} parent=0 // pred_fallthru
    _

</llo_original>
